<compile_context>
chip_gen: v7x
topology: tpu7x:2x2x1
jax: 0.10.0
libtpu: 0.0.40
codegen_flags: <defaults>
</compile_context>

<pallas_src>
import functools

import jax
import jax.numpy as jnp
from jax.experimental import pallas as pl
from jax.experimental.pallas import tpu as pltpu

CONCEPTS = ['Consolidation', 'Cavitation', 'Fibrosis', 'Patchy/Consolidative Pattern',
            'Upper Lobe Involvement', 'Pulmonary Opacities', 'Volume Loss',
            'Architectural Distortion', 'Diverse Parenchymal Patterns', 'Normal']
NUM_CONCEPTS = len(CONCEPTS)  # 10
LANE = 128


def cbm_bnn_kernel(x_ref, w_cbm_ref, w1_ref, vec_ref, b2_ref, out_ref, *, logit_lane):
    # Packed row-vector tile: row 0 = cbm bias, row 1 = hidden bias, row 2 = folded w2 row.
    b_cbm = vec_ref[0:1, :]     # (1, W)
    b1 = vec_ref[1:2, :]        # (1, W)
    w2f = vec_ref[2:3, :]       # (1, W)

    # --- synthetic CBM: concept bottleneck = sigmoid(x @ W_cbm + b_cbm), lane-padded ---
    # TODO(synk): the real cbm_model is an arbitrary external network; a Linear+sigmoid
    # concept bottleneck is substituted here.
    z = jnp.dot(x_ref[...], w_cbm_ref[...], preferred_element_type=jnp.float32) + b_cbm
    concepts = 1.0 / (1.0 + jnp.exp(-z))                       # (B, W)

    # --- BNN head (eval mode):
    # Linear(C, H) -> ReLU -> [BatchNorm folded into classifier] -> Dropout (identity)
    # -> Linear(H, 1) as VPU multiply + cross-lane reduce.
    h = jnp.dot(concepts, w1_ref[...], preferred_element_type=jnp.float32) + b1
    h = jnp.maximum(h, 0.0)
    # TODO(synk): training-mode Dropout (pltpu.prng_*) and batch-statistic BatchNorm are
    # not implemented; this is model.eval() inference semantics.
    logits = jnp.sum(h * w2f, axis=-1, keepdims=True) + b2_ref[0, 0]   # (B, 1)

    # Single merged, lane-dense output: concepts in lanes [0, C), logit in lane C.
    lane = jax.lax.broadcasted_iota(jnp.int32, out_ref.shape, 1)
    out_ref[...] = jnp.where(lane == logit_lane, logits, concepts).astype(out_ref.dtype)


def prepare_cbm_bnn_params(cbm_w, cbm_b, w1, b1, gamma, beta, run_mean, run_var, w2, b2,
                           *, eps=1e-5):
    """One-time (per model) layout plumbing: transpose, lane-pad, fold BN + classifier.

    PyTorch (out, in) weight layout in; padded kernel-ready arrays out.
    """
    f32 = jnp.float32
    C = cbm_w.shape[0]          # num_concepts
    H = w1.shape[0]             # hidden_dim
    # One common lane width; +1 keeps the logit lane (index C) inside the padded tile.
    W = ((max(C + 1, H) + LANE - 1) // LANE) * LANE

    w_cbm_k = jnp.pad(cbm_w.T.astype(f32), ((0, 0), (0, W - C)))      # (D_in, W)
    w1_k = jnp.pad(w1.T.astype(f32), ((0, W - C), (0, W - H)))        # (W, W)

    # Fold eval-mode BatchNorm1d into the classifier row + bias.
    scale = gamma.astype(f32) / jnp.sqrt(run_var.astype(f32) + eps)   # (H,)
    shift = beta.astype(f32) - run_mean.astype(f32) * scale           # (H,)
    w2_row = w2.astype(f32).reshape(-1)                               # (H,)
    w2_fold = w2_row * scale                                          # (H,)
    b2_fold = jnp.asarray(b2, f32).reshape(()) + jnp.dot(shift, w2_row)

    # Pack the three small row vectors into one full (8, W) vreg-aligned tile.
    vec_k = jnp.zeros((8, W), f32)
    vec_k = vec_k.at[0, :C].set(cbm_b.astype(f32))
    vec_k = vec_k.at[1, :H].set(b1.astype(f32))
    vec_k = vec_k.at[2, :H].set(w2_fold)

    b2_k = b2_fold.reshape(1, 1)                                      # scalar -> SMEM

    return {
        "w_cbm": w_cbm_k, "w1": w1_k, "vec": vec_k, "b2": b2_k,
        "num_concepts": C, "logit_lane": C, "width": W,
    }


def cbm_bnn_forward(x, params):
    """x: (B, D_in). params: output of prepare_cbm_bnn_params (pre-packed, hot path is
    just the Pallas call plus two slices)."""
    f32 = jnp.float32
    B = x.shape[0]
    W = params["width"]
    C = params["num_concepts"]
    ll = params["logit_lane"]

    kernel = functools.partial(cbm_bnn_kernel, logit_lane=ll)
    vmem = pl.BlockSpec(memory_space=pltpu.MemorySpace.VMEM)
    smem = pl.BlockSpec(memory_space=pltpu.MemorySpace.SMEM)

    out = pl.pallas_call(
        kernel,
        out_shape=jax.ShapeDtypeStruct((B, W), f32),
        in_specs=[vmem, vmem, vmem, vmem, smem],
        out_specs=vmem,
    )(x.astype(f32), params["w_cbm"], params["w1"], params["vec"], params["b2"])

    logits = out[:, ll:ll + 1]       # (B, 1)
    concepts = out[:, :C]            # (B, C)
    return logits, concepts


def reference_forward(x, cbm_w, cbm_b, w1, b1, gamma, beta, run_mean, run_var, w2, b2,
                      *, eps=1e-5):
    concepts = 1.0 / (1.0 + jnp.exp(-(x @ cbm_w.T + cbm_b)))
    h = jnp.maximum(concepts @ w1.T + b1, 0.0)
    h = (h - run_mean) / jnp.sqrt(run_var + eps) * gamma + beta   # eval-mode BatchNorm1d
    logits = h @ w2.T + b2                                        # Dropout identity in eval
    return logits, concepts


if __name__ == "__main__":
    B, D_IN, HIDDEN = 8, 32, 32

    key = jax.random.PRNGKey(0)
    keys = jax.random.split(key, 11)
    x        = jax.random.normal(keys[0], (B, D_IN), jnp.float32)
    cbm_w    = jax.random.normal(keys[1], (NUM_CONCEPTS, D_IN), jnp.float32) * 0.2
    cbm_b    = jax.random.normal(keys[2], (NUM_CONCEPTS,), jnp.float32) * 0.1
    w1       = jax.random.normal(keys[3], (HIDDEN, NUM_CONCEPTS), jnp.float32) * 0.3
    b1       = jax.random.normal(keys[4], (HIDDEN,), jnp.float32) * 0.1
    gamma    = 1.0 + jax.random.normal(keys[5], (HIDDEN,), jnp.float32) * 0.1
    beta     = jax.random.normal(keys[6], (HIDDEN,), jnp.float32) * 0.1
    run_mean = jax.random.normal(keys[7], (HIDDEN,), jnp.float32) * 0.1
    run_var  = jax.random.uniform(keys[8], (HIDDEN,), jnp.float32, minval=0.5, maxval=1.5)
    w2       = jax.random.normal(keys[9], (1, HIDDEN), jnp.float32) * 0.3
    b2       = jax.random.normal(keys[10], (1,), jnp.float32) * 0.1

    # One-time weight prep (off the per-call hot path).
    params = jax.block_until_ready(
        prepare_cbm_bnn_params(cbm_w, cbm_b, w1, b1, gamma, beta, run_mean, run_var, w2, b2))

    logits, concepts_out = cbm_bnn_forward(x, params)
    logits, concepts_out = jax.block_until_ready((logits, concepts_out))

    ref_logits, ref_concepts = reference_forward(
        x, cbm_w, cbm_b, w1, b1, gamma, beta, run_mean, run_var, w2, b2)

    assert logits.shape == (B, 1), logits.shape
    assert concepts_out.shape == (B, NUM_CONCEPTS), concepts_out.shape
    assert jnp.allclose(concepts_out, ref_concepts, atol=1e-4, rtol=1e-4), (
        f"concepts max abs err {jnp.max(jnp.abs(concepts_out - ref_concepts))}")
    assert jnp.allclose(logits, ref_logits, atol=1e-4, rtol=1e-4), (
        f"logits max abs err {jnp.max(jnp.abs(logits - ref_logits))}")

    print("KERNEL_OK")
</pallas_src>

<mosaic_0001>
module attributes {stable_mosaic.version = 11 : i64} {
  func.func @cbm_bnn_kernel(%arg0: memref<8x32xf32, #tpu.memory_space<vmem>>, %arg1: memref<32x128xf32, #tpu.memory_space<vmem>>, %arg2: memref<128x128xf32, #tpu.memory_space<vmem>>, %arg3: memref<8x128xf32, #tpu.memory_space<vmem>>, %arg4: memref<1x1xf32, #tpu.memory_space<smem>>, %arg5: memref<8x128xf32, #tpu.memory_space<vmem>>) attributes {dimension_semantics = [], scalar_prefetch = 0 : i64, scratch_operands = 0 : i64, tpu.core_type = #tpu.core_type<tc>} {
    %c0 = arith.constant 0 : index
    %c0_0 = arith.constant 0 : index
    %0 = vector.load %arg3[%c0, %c0_0] : memref<8x128xf32, #tpu.memory_space<vmem>>, vector<1x128xf32>
    %c1 = arith.constant 1 : index
    %c0_1 = arith.constant 0 : index
    %1 = vector.load %arg3[%c1, %c0_1] : memref<8x128xf32, #tpu.memory_space<vmem>>, vector<1x128xf32>
    %c2 = arith.constant 2 : index
    %c0_2 = arith.constant 0 : index
    %2 = vector.load %arg3[%c2, %c0_2] : memref<8x128xf32, #tpu.memory_space<vmem>>, vector<1x128xf32>
    %c0_3 = arith.constant 0 : index
    %c0_4 = arith.constant 0 : index
    %3 = vector.load %arg0[%c0_3, %c0_4] : memref<8x32xf32, #tpu.memory_space<vmem>>, vector<8x32xf32>
    %c0_5 = arith.constant 0 : index
    %c0_6 = arith.constant 0 : index
    %4 = vector.load %arg1[%c0_5, %c0_6] : memref<32x128xf32, #tpu.memory_space<vmem>>, vector<32x128xf32>
    %cst = arith.constant dense<0.000000e+00> : vector<8x128xf32>
    %5 = tpu.matmul %3, %4, %cst {dimension_numbers = #tpu.dot_dimension_numbers<[1], [0], [0], [1], [0, 0, 1, 1], [], []>} : vector<8x32xf32>, vector<32x128xf32>, vector<8x128xf32> -> vector<8x128xf32>
    %6 = vector.broadcast %0 : vector<1x128xf32> to vector<8x128xf32>
    %7 = arith.addf %5, %6 : vector<8x128xf32>
    %cst_7 = arith.constant 0.000000e+00 : f32
    %8 = vector.broadcast %cst_7 : f32 to vector<8x128xf32>
    %9 = arith.subf %8, %7 : vector<8x128xf32>
    %10 = math.exp %9 : vector<8x128xf32>
    %cst_8 = arith.constant 1.000000e+00 : f32
    %11 = vector.broadcast %cst_8 : f32 to vector<8x128xf32>
    %12 = arith.addf %11, %10 : vector<8x128xf32>
    %cst_9 = arith.constant 1.000000e+00 : f32
    %13 = vector.broadcast %cst_9 : f32 to vector<8x128xf32>
    %14 = arith.divf %13, %12 : vector<8x128xf32>
    %c0_10 = arith.constant 0 : index
    %c0_11 = arith.constant 0 : index
    %15 = vector.load %arg2[%c0_10, %c0_11] : memref<128x128xf32, #tpu.memory_space<vmem>>, vector<128x128xf32>
    %cst_12 = arith.constant dense<0.000000e+00> : vector<8x128xf32>
    %16 = tpu.matmul %14, %15, %cst_12 {dimension_numbers = #tpu.dot_dimension_numbers<[1], [0], [0], [1], [0, 0, 1, 1], [], []>} : vector<8x128xf32>, vector<128x128xf32>, vector<8x128xf32> -> vector<8x128xf32>
    %17 = vector.broadcast %1 : vector<1x128xf32> to vector<8x128xf32>
    %18 = arith.addf %16, %17 : vector<8x128xf32>
    %cst_13 = arith.constant 0.000000e+00 : f32
    %19 = vector.broadcast %cst_13 : f32 to vector<8x128xf32>
    %20 = arith.maximumf %18, %19 : vector<8x128xf32>
    %21 = vector.broadcast %2 : vector<1x128xf32> to vector<8x128xf32>
    %22 = arith.mulf %20, %21 : vector<8x128xf32>
    %cst_14 = arith.constant dense<0.000000e+00> : vector<8xf32>
    %23 = vector.multi_reduction <add>, %22, %cst_14 [1] : vector<8x128xf32> to vector<8xf32>
    %24 = vector.shape_cast %23 : vector<8xf32> to vector<8x1xf32>
    %c0_15 = arith.constant 0 : index
    %c0_16 = arith.constant 0 : index
    %25 = memref.load %arg4[%c0_15, %c0_16] : memref<1x1xf32, #tpu.memory_space<smem>>
    %26 = vector.broadcast %25 : f32 to vector<8x1xf32>
    %27 = arith.addf %24, %26 : vector<8x1xf32>
    %28 = tpu.iota {dimensions = array<i32: 1>} : vector<8x128xi32>
    %c10_i32 = arith.constant 10 : i32
    %29 = vector.broadcast %c10_i32 : i32 to vector<8x128xi32>
    %30 = arith.cmpi eq, %28, %29 : vector<8x128xi32>
    %31 = vector.shape_cast %27 : vector<8x1xf32> to vector<8x1xf32>
    %32 = vector.broadcast %31 : vector<8x1xf32> to vector<8x128xf32>
    %33 = arith.select %30, %32, %14 : vector<8x128xi1>, vector<8x128xf32>
    %c0_17 = arith.constant 0 : index
    %c0_18 = arith.constant 0 : index
    %34 = vector.load %arg5[%c0_17, %c0_18] : memref<8x128xf32, #tpu.memory_space<vmem>>, vector<8x128xf32>
    tpu.vector_store %arg5[%c0_17, %c0_18], %33 {strides = array<i32>} : memref<8x128xf32, #tpu.memory_space<vmem>>, vector<8x128xf32>,
    return
  }
}

</mosaic_0001>

<llo_original>
// kernel: tpu_custom_call.1
$region0: #{tpu_custom_call.1}
  #allocation0 [shape = 'u32[]', space=smem, size = 0x4, offset = 0x4, fixed_abs, tag = 'smem constant byte address 0x4 - core index']
  #allocation1 [shape = 'u32[144,128]{1,0:T(1,128)}', space=vmem, size = 0x12000, scoped, tag = 'internal scratch']
  #allocation2 [shape = 'f32[1,1]{1,0:T(1,128)S(6)}', space=smem, size = 0x200, scoped, tag = 'scoped memory for tpu_custom_call.1']
  %s0 = inlined_call_operand.hbm [shape: f32[8,32], index: 0, kind: input, shape index: {}]
  %s1 = inlined_call_operand.hbm [shape: f32[32,128], index: 1, kind: input, shape index: {}]
  %s2 = inlined_call_operand.hbm [shape: f32[128,128], index: 2, kind: input, shape index: {}]
  %s3 = inlined_call_operand.vmem [shape: f32[8,128], index: 3, kind: input, shape index: {}]
  %s4 = inlined_call_operand.<no memory space> [shape: f32[1,1], index: 4, kind: input, shape index: {}]
  %s5 = inlined_call_operand.hbm [shape: f32[8,128], index: 5, kind: output, shape index: {}]
  %s6 = sld [smem:[#allocation0]]
  $region42: #{tpu_custom_call.1} parent=0
    _
  %s8 = ssub.s32 1, %s6
  %s9 = scalar_select 0, %s8, %s6
  %10 = sst [smem:[#allocation2]] %s4
  $region1: #{tpu_custom_call.1} parent=0
    #allocation3 [shape = 'u8[4096]{0}', space=vmem, size = 0x1000, scoped, tag = 'input window, operand 0, single buffered']
    #allocation4 [shape = 's32[1]{0}', space=sflag, size = 0x4, scoped, tag = 'scoped memory for tpu_custom_call.1']
    #allocation5 [shape = 's32[1]{0}', space=sflag, size = 0x4, scoped, tag = 'scoped memory for tpu_custom_call.1']
    #allocation6 [shape = 'u8[16384]{0}', space=vmem, size = 0x4000, scoped, tag = 'input window, operand 1, single buffered']
    #allocation7 [shape = 's32[1]{0}', space=sflag, size = 0x4, scoped, tag = 'scoped memory for tpu_custom_call.1']
    #allocation8 [shape = 'u8[65536]{0}', space=vmem, size = 0x10000, scoped, tag = 'input window, operand 2, single buffered']
    #allocation9 [shape = 'u8[4096]{0}', space=vmem, size = 0x1000, scoped, tag = 'output window, operand 0, single buffered']
    %11 = vsyncpa [#allocation4], 0
    %12 = vsyncpa [#allocation7], 0
    %13 = vsyncpa [#allocation5], 0
    // Predicated region
    $region2: #{tpu_custom_call.1} parent=1 // pred_check
      _
    $region3: #{tpu_custom_call.1} parent=1 // pred_check_branch
      %15 = sbr.rel (0) target = $region5
    $region4: #{tpu_custom_call.1} parent=1 // pred_region
      %s17 = ssub.s32 128, 128
      %18 = vsyncadd [#allocation4], %s17
      %s20 = sshll.u32 [#allocation3], 4
      %s21 = int_to_ptr.vmem [resolvable:$true] %s20
      %23 = dma.hbm_to_vmem [thread:$0]  %s0, 128, %s21, [#allocation4]
    $region5: #{tpu_custom_call.1} parent=1 // pred_fallthru
      _
    // Predicated region
    $region6: #{tpu_custom_call.1} parent=1 // pred_check
      _
    $region7: #{tpu_custom_call.1} parent=1 // pred_check_branch
      %25 = sbr.rel (0) target = $region9
    $region8: #{tpu_custom_call.1} parent=1 // pred_region
      %s27 = ssub.s32 512, 512
      %28 = vsyncadd [#allocation7], %s27
      %s29 = sshll.u32 [#allocation6], 4
      %s30 = int_to_ptr.vmem [resolvable:$true] %s29
      %35 = dma.hbm_to_vmem [thread:$0]  %s1, 512, %s30, [#allocation7], 128, 128, 8
    $region9: #{tpu_custom_call.1} parent=1 // pred_fallthru
      _
    // Predicated region
    $region10: #{tpu_custom_call.1} parent=1 // pred_check
      _
    $region11: #{tpu_custom_call.1} parent=1 // pred_check_branch
      %37 = sbr.rel (0) target = $region13
    $region12: #{tpu_custom_call.1} parent=1 // pred_region
      %s39 = ssub.s32 2048, 2048
      %40 = vsyncadd [#allocation7], %s39
      %s41 = sshll.u32 [#allocation8], 4
      %s42 = int_to_ptr.vmem [resolvable:$true] %s41
      %47 = dma.hbm_to_vmem [thread:$0]  %s2, 2048, %s42, [#allocation7], 128, 128, 8
    $region13: #{tpu_custom_call.1} parent=1 // pred_fallthru
      _
    // Predicated region
    $region14: #{tpu_custom_call.1} parent=1 // pred_check
      _
    $region15: #{tpu_custom_call.1} parent=1 // pred_check_branch
      %49 = sbr.rel (0) target = $region17
    $region16: #{tpu_custom_call.1} parent=1 // pred_region
      _
    $region17: #{tpu_custom_call.1} parent=1 // pred_fallthru
      _
    // Predicated region
    $region18: #{tpu_custom_call.1} parent=1 // pred_check
      _
    $region19: #{tpu_custom_call.1} parent=1 // pred_check_branch
      %51 = sbr.rel (0) target = $region21
    $region20: #{tpu_custom_call.1} parent=1 // pred_region
      _
    $region21: #{tpu_custom_call.1} parent=1 // pred_fallthru
      _
    // Predicated region
    $region22: #{tpu_custom_call.1} parent=1 // pred_check
      _
    $region23: #{tpu_custom_call.1} parent=1 // pred_check_branch
      %53 = sbr.rel (0) target = $region25
    $region24: #{tpu_custom_call.1} parent=1 // pred_region
      %54 = dma.done [#allocation4], 128
    $region25: #{tpu_custom_call.1} parent=1 // pred_fallthru
      _
    // Predicated region
    $region26: #{tpu_custom_call.1} parent=1 // pred_check
      _
    $region27: #{tpu_custom_call.1} parent=1 // pred_check_branch
      %56 = sbr.rel (0) target = $region29
    $region28: #{tpu_custom_call.1} parent=1 // pred_region
      %57 = dma.done [#allocation7], 512
    $region29: #{tpu_custom_call.1} parent=1 // pred_fallthru
      _
    // Predicated region
    $region30: #{tpu_custom_call.1} parent=1 // pred_check
      _
    $region31: #{tpu_custom_call.1} parent=1 // pred_check_branch
      %59 = sbr.rel (0) target = $region33
    $region32: #{tpu_custom_call.1} parent=1 // pred_region
      %60 = dma.done [#allocation7], 2048
    $region33: #{tpu_custom_call.1} parent=1 // pred_fallthru
      _
    %v61 = vld [vmem:[%s3] sm:$0x1]
    %v62 = vld [vmem:[%s3 + $0x1] sm:$0x1]
    %v63 = vld [vmem:[%s3 + $0x2] sm:$0x1]
    %v64 = vld [vmem:[#allocation3] sm:$0xff]
    %v65 = vld [vmem:[#allocation6] sm:$0xff]
    %v66 = vld [vmem:[#allocation6 + $0x8] sm:$0xff]
    %v67 = vld [vmem:[#allocation6 + $0x10] sm:$0xff]
    %v68 = vld [vmem:[#allocation6 + $0x18] sm:$0xff]
    %v69 = vlaneseq
    %v70 = vshrl.u32 %v69, 7
    %v71 = vsub.s32 0, %v70
    %v72 = vrot.slane %v61, %v71
    %vm73 = vcmask 261120
    %v75 = vsel %vm73, %v64, 0
    %77 = vmatprep.subr.mxu0 0.0
    %78 = vmatpush1.msra.mxu0 %v65
    %79 = vmatprep.subr.mxu0 0.0
    %80 = vmatpush1.msra.mxu0 %v66
    %81 = vmatprep.subr.mxu0 0.0
    %82 = vmatpush1.msra.mxu0 %v67
    %83 = vmatprep.subr.mxu0 0.0
    %84 = vmatpush1.msra.mxu0 %v68
    %85 = vmatprep.subr.mxu0 0.0
    %86 = vmatpush1.msra.mxu0 0.0
    %87 = vmatprep.subr.mxu0 0.0
    %88 = vmatpush1.msra.mxu0 0.0
    %89 = vmatprep.subr.mxu0 0.0
    %90 = vmatpush1.msra.mxu0 0.0
    %91 = vmatprep.subr.mxu0 0.0
    %92 = vmatpush1.msra.mxu0 0.0
    %93 = vmatprep.subr.mxu0 0.0
    %94 = vmatpush1.msra.mxu0 0.0
    %95 = vmatprep.subr.mxu0 0.0
    %96 = vmatpush1.msra.mxu0 0.0
    %97 = vmatprep.subr.mxu0 0.0
    %98 = vmatpush1.msra.mxu0 0.0
    %99 = vmatprep.subr.mxu0 0.0
    %100 = vmatpush1.msra.mxu0 0.0
    %101 = vmatprep.subr.mxu0 0.0
    %102 = vmatpush1.msra.mxu0 0.0
    %103 = vmatprep.subr.mxu0 0.0
    %104 = vmatpush1.msra.mxu0 0.0
    %105 = vmatprep.subr.mxu0 0.0
    %106 = vmatpush1.msra.mxu0 0.0
    %107 = vmatprep.subr.mxu0 0.0
    %108 = vmatpush1.msra.mxu0 0.0
    %109 = vmatprep.subr.mxu0 0.0
    %110 = vmatpush1.msra.mxu0 0.0
    %111 = vmatprep.subr.mxu0 0.0
    %112 = vmatpush1.msra.mxu0 0.0
    %113 = vmatprep.subr.mxu0 0.0
    %114 = vmatpush1.msra.mxu0 0.0
    %115 = vmatprep.subr.mxu0 0.0
    %116 = vmatpush1.msra.mxu0 0.0
    %117 = vmatprep.subr.mxu0 0.0
    %118 = vmatpush1.msra.mxu0 0.0
    %119 = vmatprep.subr.mxu0 0.0
    %120 = vmatpush1.msra.mxu0 0.0
    %121 = vmatprep.subr.mxu0 0.0
    %122 = vmatpush1.msra.mxu0 0.0
    %123 = vmatprep.subr.mxu0 0.0
    %124 = vmatpush1.msra.mxu0 0.0
    %125 = vmatprep.subr.mxu0 0.0
    %126 = vmatpush1.msra.mxu0 0.0
    %127 = vmatprep.subr.mxu0 0.0
    %128 = vmatpush1.msra.mxu0 0.0
    %129 = vmatprep.subr.mxu0 0.0
    %130 = vmatpush1.msra.mxu0 0.0
    %131 = vmatprep.subr.mxu0 0.0
    %132 = vmatpush1.msra.mxu0 0.0
    %133 = vmatprep.subr.mxu0 0.0
    %134 = vmatpush1.msra.mxu0 0.0
    %135 = vmatprep.subr.mxu0 0.0
    %136 = vmatpush1.msra.mxu0 0.0
    %137 = vmatprep.subr.mxu0 0.0
    %138 = vmatpush1.msra.mxu0 0.0
    %139 = vmatprep.subr.mxu0 0.0
    %140 = vmatpush1.msra.mxu0 0.0
    %141 = vmatprep.mubr.f32.mxu0 0.0
    %142 = vmatmul.mubr.f32.gmra.mrb[0].mxu0 %v75
    %v143 = vpop.f32.mrb[0].mxu0
    %v144 = vadd.f32 %v72, %v143
    %v145 = vpop.f32.mrb[0].mxu0
    %146 = vdwg.mxu0
    %v147 = vsub.f32 0.0, %v144
    %v148 = vmul.f32 %v147, 1.442695
    %v149 = vpow.pop %v148
    %v150 = vadd.f32 %v149, 1.0
    %v151 = vrcp.pop %v150
    %v152 = vmul.f32 1.0, %v151
    %v153 = vld [vmem:[#allocation8] sm:$0xff]
    %v154 = vld [vmem:[#allocation8 + $0x8] sm:$0xff]
    %v155 = vld [vmem:[#allocation8 + $0x10] sm:$0xff]
    %v156 = vld [vmem:[#allocation8 + $0x18] sm:$0xff]
    %v157 = vld [vmem:[#allocation8 + $0x20] sm:$0xff]
    %v158 = vld [vmem:[#allocation8 + $0x28] sm:$0xff]
    %v159 = vld [vmem:[#allocation8 + $0x30] sm:$0xff]
    %v160 = vld [vmem:[#allocation8 + $0x38] sm:$0xff]
    %v161 = vld [vmem:[#allocation8 + $0x40] sm:$0xff]
    %v162 = vld [vmem:[#allocation8 + $0x48] sm:$0xff]
    %v163 = vld [vmem:[#allocation8 + $0x50] sm:$0xff]
    %v164 = vld [vmem:[#allocation8 + $0x58] sm:$0xff]
    %v165 = vld [vmem:[#allocation8 + $0x60] sm:$0xff]
    %v166 = vld [vmem:[#allocation8 + $0x68] sm:$0xff]
    %v167 = vld [vmem:[#allocation8 + $0x70] sm:$0xff]
    %v168 = vld [vmem:[#allocation8 + $0x78] sm:$0xff]
    %v169 = vlaneseq
    %v170 = vshrl.u32 %v169, 7
    %v171 = vsub.s32 0, %v170
    %v172 = vrot.slane %v62, %v171
    %173 = vmatprep.subr.mxu0 0.0
    %174 = vmatpush1.msra.mxu0 %v153
    %175 = vmatprep.subr.mxu0 0.0
    %176 = vmatpush1.msra.mxu0 %v154
    %177 = vmatprep.subr.mxu0 0.0
    %178 = vmatpush1.msra.mxu0 %v155
    %179 = vmatprep.subr.mxu0 0.0
    %180 = vmatpush1.msra.mxu0 %v156
    %181 = vmatprep.subr.mxu0 0.0
    %182 = vmatpush1.msra.mxu0 %v157
    %183 = vmatprep.subr.mxu0 0.0
    %184 = vmatpush1.msra.mxu0 %v158
    %185 = vmatprep.subr.mxu0 0.0
    %186 = vmatpush1.msra.mxu0 %v159
    %187 = vmatprep.subr.mxu0 0.0
    %188 = vmatpush1.msra.mxu0 %v160
    %189 = vmatprep.subr.mxu0 0.0
    %190 = vmatpush1.msra.mxu0 %v161
    %191 = vmatprep.subr.mxu0 0.0
    %192 = vmatpush1.msra.mxu0 %v162
    %193 = vmatprep.subr.mxu0 0.0
    %194 = vmatpush1.msra.mxu0 %v163
    %195 = vmatprep.subr.mxu0 0.0
    %196 = vmatpush1.msra.mxu0 %v164
    %197 = vmatprep.subr.mxu0 0.0
    %198 = vmatpush1.msra.mxu0 %v165
    %199 = vmatprep.subr.mxu0 0.0
    %200 = vmatpush1.msra.mxu0 %v166
    %201 = vmatprep.subr.mxu0 0.0
    %202 = vmatpush1.msra.mxu0 %v167
    %203 = vmatprep.subr.mxu0 0.0
    %204 = vmatpush1.msra.mxu0 %v168
    %205 = vmatprep.subr.mxu0 0.0
    %206 = vmatpush1.msra.mxu0 0.0
    %207 = vmatprep.subr.mxu0 0.0
    %208 = vmatpush1.msra.mxu0 0.0
    %209 = vmatprep.subr.mxu0 0.0
    %210 = vmatpush1.msra.mxu0 0.0
    %211 = vmatprep.subr.mxu0 0.0
    %212 = vmatpush1.msra.mxu0 0.0
    %213 = vmatprep.subr.mxu0 0.0
    %214 = vmatpush1.msra.mxu0 0.0
    %215 = vmatprep.subr.mxu0 0.0
    %216 = vmatpush1.msra.mxu0 0.0
    %217 = vmatprep.subr.mxu0 0.0
    %218 = vmatpush1.msra.mxu0 0.0
    %219 = vmatprep.subr.mxu0 0.0
    %220 = vmatpush1.msra.mxu0 0.0
    %221 = vmatprep.subr.mxu0 0.0
    %222 = vmatpush1.msra.mxu0 0.0
    %223 = vmatprep.subr.mxu0 0.0
    %224 = vmatpush1.msra.mxu0 0.0
    %225 = vmatprep.subr.mxu0 0.0
    %226 = vmatpush1.msra.mxu0 0.0
    %227 = vmatprep.subr.mxu0 0.0
    %228 = vmatpush1.msra.mxu0 0.0
    %229 = vmatprep.subr.mxu0 0.0
    %230 = vmatpush1.msra.mxu0 0.0
    %231 = vmatprep.subr.mxu0 0.0
    %232 = vmatpush1.msra.mxu0 0.0
    %233 = vmatprep.subr.mxu0 0.0
    %234 = vmatpush1.msra.mxu0 0.0
    %235 = vmatprep.subr.mxu0 0.0
    %236 = vmatpush1.msra.mxu0 0.0
    %237 = vmatprep.mubr.f32.mxu0 0.0
    %238 = vmatmul.mubr.f32.gmra.mrb[0].mxu0 %v152
    %v239 = vpop.f32.mrb[0].mxu0
    %v240 = vadd.f32 %v172, %v239
    %v241 = vpop.f32.mrb[0].mxu0
    %242 = vdwg.mxu0
    %v243 = vmax.f32 %v240, 0.0
    %v244 = vlaneseq
    %v245 = vshrl.u32 %v244, 7
    %v246 = vsub.s32 0, %v245
    %v247 = vrot.slane %v63, %v246
    %v248 = vmul.f32 %v243, %v247
    %249 = vadd.xlane.f32.xlu0 %v248
    %v250 = vpop.xlane.xlu0 %249
    %s251 = sld [smem:[#allocation2]]
    %v252 = vstv %s251
    %v253 = vadd.f32 %v250, %v252
    %v254 = vlaneseq
    %v255 = vand.u32 %v254, 127
    %vm256 = vcmp.eq.s32.totalorder %v255, 10
    %v257 = vsel %vm256, %v253, %v152
    %258 = vst [vmem:[#allocation9] sm:$0xff] %v257
    // Predicated region
    $region34: #{tpu_custom_call.1} parent=1 // pred_check
      _
    $region35: #{tpu_custom_call.1} parent=1 // pred_check_branch
      %260 = sbr.rel (0) target = $region37
    $region36: #{tpu_custom_call.1} parent=1 // pred_region
      %s262 = ssub.s32 128, 128
      %263 = vsyncadd [#allocation5], %s262
      %s265 = sshll.u32 [#allocation9], 4
      %s266 = int_to_ptr.vmem [resolvable:$true] %s265
      %268 = dma.vmem_to_hbm [thread:$0]  %s266, 128, %s5, [#allocation5]
    $region37: #{tpu_custom_call.1} parent=1 // pred_fallthru
      _
    // Predicated region
    $region38: #{tpu_custom_call.1} parent=1 // pred_check
      _
    $region39: #{tpu_custom_call.1} parent=1 // pred_check_branch
      %270 = sbr.rel (0) target = $region41
    $region40: #{tpu_custom_call.1} parent=1 // pred_region
      %271 = dma.done [#allocation5], 128
    $region41: #{tpu_custom_call.1} parent=1 // pred_fallthru
      _
    %272 = vsyncpa [#allocation4], 1
    %273 = vsyncpa [#allocation7], 1
    %274 = vsyncpa [#allocation5], 1

</llo_original>
